<compile_context>
chip_gen: v6e
topology: v6e:2x2x1
jax: 0.10.0
libtpu: 0.0.40
codegen_flags: <defaults>
</compile_context>

<pallas_src>
import functools

import jax
import jax.numpy as jnp
from jax.experimental import pallas as pl
from jax.experimental.pallas import tpu as pltpu

C_IN = 2304
C_OUT = 96
C_OUT_PAD = 128          # lane-dense output width (no masked vst.msk stores)


def _round_up(x, m):
    return ((x + m - 1) // m) * m


def _pick_tile_m():
    """Rows per grid step: 512 on v5e (slower HBM, smaller default VMEM scope),
    1024 on v6e/v7x.  Double-buffered X footprint at 1024 rows is ~19 MiB."""
    try:
        kind = jax.devices()[0].device_kind.lower()
    except Exception:  # pragma: no cover - conservative fallback
        return 512
    return 512 if "v5" in kind else 1024


def _conv1x1_kernel(x_ref, w_ref, b_ref, o_ref):
    # x_ref: (TILE_M, C_IN)   w_ref: (C_IN, C_OUT_PAD)   b_ref: (1, C_OUT_PAD)
    # o_ref: (TILE_M, C_OUT_PAD)
    acc = jnp.dot(x_ref[...], w_ref[...], preferred_element_type=jnp.float32)
    o_ref[...] = (acc + b_ref[...]).astype(o_ref.dtype)


def prepare_conv_params(weight, bias):
    """One-time parameter prep (hoisted out of the hot path).

    weight: [C_OUT, C_IN, 1, 1] -> padded [C_IN, C_OUT_PAD] (zero columns)
    bias:   [C_OUT]             -> padded [1, C_OUT_PAD]
    """
    w2d = weight.reshape(C_OUT, C_IN).T                        # [C_IN, C_OUT]
    w_pad = jnp.pad(w2d, ((0, 0), (0, C_OUT_PAD - C_OUT)))
    b_pad = jnp.pad(bias.reshape(1, C_OUT), ((0, 0), (0, C_OUT_PAD - C_OUT)))
    return w_pad, b_pad


def _conv1x1_padded(x2d, w_pad, b_pad, tile, n_pad):
    """Lane-dense padded GEMM: x2d [n_pad, C_IN] -> [n_pad, C_OUT_PAD]."""
    grid = (n_pad // tile,)
    itemsize = x2d.dtype.itemsize
    flops = 2 * n_pad * C_IN * C_OUT_PAD
    bytes_accessed = (n_pad * C_IN * itemsize          # X stream
                      + C_IN * C_OUT_PAD * 4           # resident weights
                      + n_pad * C_OUT_PAD * itemsize)  # output

    return pl.pallas_call(
        _conv1x1_kernel,
        out_shape=jax.ShapeDtypeStruct((n_pad, C_OUT_PAD), x2d.dtype),
        grid=grid,
        in_specs=[
            # X tile streams through VMEM (double-buffered by default).
            pl.BlockSpec((tile, C_IN), lambda i: (i, 0)),
            # Weights / bias: constant index_map -> resident; single-buffered.
            pl.BlockSpec((C_IN, C_OUT_PAD), lambda i: (0, 0),
                         pipeline_mode=pl.Buffered(1)),
            pl.BlockSpec((1, C_OUT_PAD), lambda i: (0, 0),
                         pipeline_mode=pl.Buffered(1)),
        ],
        out_specs=pl.BlockSpec((tile, C_OUT_PAD), lambda i: (i, 0)),
        compiler_params=pltpu.CompilerParams(
            dimension_semantics=("parallel",),
            vmem_limit_bytes=32 << 20,
        ),
        cost_estimate=pl.CostEstimate(
            flops=flops, transcendentals=0, bytes_accessed=bytes_accessed),
    )(x2d, w_pad, b_pad)


@functools.partial(jax.jit, static_argnames=("tile_m", "small_n_threshold"))
def conv1x1(x_nchw, w_pad, b_pad, tile_m=None, small_n_threshold=0):
    """x_nchw: [N, C_in, 1, 1]; w_pad: [C_in, 128] f32; b_pad: [1, 128] f32."""
    n, c_in, h, w = x_nchw.shape
    assert (h, w) == (1, 1) and c_in == C_IN

    x2d = x_nchw.reshape(n, c_in)

    # Small-N fast path: at N ~ 1 the cost is entirely the weight DMA + call
    # overhead; let XLA fuse a plain matmul instead (opt-in, static branch).
    if n < small_n_threshold:
        y = jnp.dot(x2d, w_pad, preferred_element_type=jnp.float32) + b_pad
        return y[:, :C_OUT].astype(x_nchw.dtype).reshape(n, C_OUT, 1, 1)

    if tile_m is None:
        tile_m = _pick_tile_m()

    # Row padding only to the sublane multiple of the dtype (8 rows for f32,
    # 16 for bf16), then a row tile that divides the padded row count so no
    # full-tile garbage rows are ever DMA'd or run through the MXU.
    row_align = 8 * max(1, 4 // x2d.dtype.itemsize)
    n_pad = _round_up(n, row_align)
    if n_pad <= tile_m:
        tile = n_pad                                   # single grid step
    else:
        steps = -(-n_pad // tile_m)                    # ceil-div
        tile = _round_up(-(-n_pad // steps), row_align)
        n_pad = _round_up(n_pad, tile)                 # waste < row_align*steps
    if n_pad != n:
        x2d = jnp.pad(x2d, ((0, n_pad - n), (0, 0)))

    y_pad = _conv1x1_padded(x2d, w_pad, b_pad, tile, n_pad)

    # Strip row padding and the zero output-channel padding (96 real channels).
    # Consumers that tolerate the padded [n_pad, 128] layout should call
    # _conv1x1_padded directly and fuse this slice into their own op.
    return y_pad[:n, :C_OUT].reshape(n, C_OUT, 1, 1)


def _reference(x_nchw, weight, bias):
    n = x_nchw.shape[0]
    x2d = x_nchw.reshape(n, C_IN)
    y = x2d @ weight.reshape(C_OUT, C_IN).T + bias
    return y.reshape(n, C_OUT, 1, 1)


if __name__ == "__main__":
    key = jax.random.PRNGKey(0)
    kx1, kx2, kx3, kw, kb = jax.random.split(key, 5)

    # Deterministic synthetic parameters (PyTorch-style uniform init scale).
    bound = 1.0 / (C_IN ** 0.5)
    weight = jax.random.uniform(kw, (C_OUT, C_IN, 1, 1), jnp.float32, -bound, bound)
    bias = jax.random.uniform(kb, (C_OUT,), jnp.float32, -bound, bound)

    # One-time parameter prep (outside the hot path).
    w_pad, b_pad = prepare_conv_params(weight, bias)

    # Case 1: the module's own shape [1, 2304, 1, 1] through the Pallas path.
    x1 = jax.random.normal(kx1, (1, C_IN, 1, 1), dtype=jnp.float32)
    y1 = conv1x1(x1, w_pad, b_pad)
    jax.block_until_ready(y1)
    ref1 = _reference(x1, weight, bias)
    assert y1.shape == (1, C_OUT, 1, 1)
    assert jnp.allclose(y1, ref1, atol=1e-4, rtol=1e-4)

    # Case 1b: same shape through the small-N XLA fallback.
    y1f = conv1x1(x1, w_pad, b_pad, small_n_threshold=64)
    jax.block_until_ready(y1f)
    assert jnp.allclose(y1f, ref1, atol=1e-4, rtol=1e-4)

    # Case 2: awkward N with a small forced tile -> multi-step grid, low-waste
    # row tiling (tile divides the padded row count; no full-tile padding).
    x2 = jax.random.normal(kx2, (520, C_IN, 1, 1), dtype=jnp.float32)
    y2 = conv1x1(x2, w_pad, b_pad, tile_m=128)
    jax.block_until_ready(y2)
    ref2 = _reference(x2, weight, bias)
    assert y2.shape == (520, C_OUT, 1, 1)
    assert jnp.allclose(y2, ref2, atol=1e-4, rtol=1e-4)

    # Case 3: larger batch with the device-tuned default tile.
    x3 = jax.random.normal(kx3, (1024, C_IN, 1, 1), dtype=jnp.float32)
    y3 = conv1x1(x3, w_pad, b_pad)
    jax.block_until_ready(y3)
    ref3 = _reference(x3, weight, bias)
    assert y3.shape == (1024, C_OUT, 1, 1)
    assert jnp.allclose(y3, ref3, atol=1e-4, rtol=1e-4)

    print("KERNEL_OK")
</pallas_src>

<mosaic_0001>
module attributes {stable_mosaic.version = 11 : i64} {
  func.func @_conv1x1_kernel(%arg0: i32, %arg1: memref<8x2304xf32, #tpu.memory_space<vmem>>, %arg2: memref<2304x128xf32, #tpu.memory_space<vmem>>, %arg3: memref<1x128xf32, #tpu.memory_space<vmem>>, %arg4: memref<8x128xf32, #tpu.memory_space<vmem>>) attributes {dimension_semantics = [#tpu.dimension_semantics<parallel>], iteration_bounds = array<i64: 1>, scalar_prefetch = 0 : i64, scratch_operands = 0 : i64, tpu.core_type = #tpu.core_type<tc>, window_params = [{transform_indices = @transform_0, window_bounds = array<i64: 8, 2304>}, {pipeline_mode = #tpu.pipeline_mode<synchronous>, transform_indices = @transform_1, window_bounds = array<i64: 2304, 128>}, {pipeline_mode = #tpu.pipeline_mode<synchronous>, transform_indices = @transform_2, window_bounds = array<i64: 1, 128>}, {transform_indices = @transform_3, window_bounds = array<i64: 8, 128>}]} {
    %c0 = arith.constant 0 : index
    %c0_0 = arith.constant 0 : index
    %0 = vector.load %arg1[%c0, %c0_0] : memref<8x2304xf32, #tpu.memory_space<vmem>>, vector<8x2304xf32>
    %c0_1 = arith.constant 0 : index
    %c0_2 = arith.constant 0 : index
    %1 = vector.load %arg2[%c0_1, %c0_2] : memref<2304x128xf32, #tpu.memory_space<vmem>>, vector<2304x128xf32>
    %cst = arith.constant dense<0.000000e+00> : vector<8x128xf32>
    %2 = tpu.matmul %0, %1, %cst {dimension_numbers = #tpu.dot_dimension_numbers<[1], [0], [0], [1], [0, 0, 1, 1], [], []>} : vector<8x2304xf32>, vector<2304x128xf32>, vector<8x128xf32> -> vector<8x128xf32>
    %c0_3 = arith.constant 0 : index
    %c0_4 = arith.constant 0 : index
    %3 = vector.load %arg3[%c0_3, %c0_4] : memref<1x128xf32, #tpu.memory_space<vmem>>, vector<1x128xf32>
    %4 = vector.broadcast %3 : vector<1x128xf32> to vector<8x128xf32>
    %5 = arith.addf %2, %4 : vector<8x128xf32>
    %c0_5 = arith.constant 0 : index
    %c0_6 = arith.constant 0 : index
    %6 = vector.load %arg4[%c0_5, %c0_6] : memref<8x128xf32, #tpu.memory_space<vmem>>, vector<8x128xf32>
    tpu.vector_store %arg4[%c0_5, %c0_6], %5 {strides = array<i32>} : memref<8x128xf32, #tpu.memory_space<vmem>>, vector<8x128xf32>,
    return
  }
  func.func @transform_0(%arg0: i32) -> (i32, i32) {
    %c0_i32 = arith.constant 0 : i32
    %c0_i32_0 = arith.constant 0 : i32
    return %arg0, %c0_i32 : i32, i32
  }
  func.func @transform_1(%arg0: i32) -> (i32, i32) {
    %c0_i32 = arith.constant 0 : i32
    %c0_i32_0 = arith.constant 0 : i32
    %c0_i32_1 = arith.constant 0 : i32
    return %c0_i32, %c0_i32_0 : i32, i32
  }
  func.func @transform_2(%arg0: i32) -> (i32, i32) {
    %c0_i32 = arith.constant 0 : i32
    %c0_i32_0 = arith.constant 0 : i32
    %c0_i32_1 = arith.constant 0 : i32
    return %c0_i32, %c0_i32_0 : i32, i32
  }
  func.func @transform_3(%arg0: i32) -> (i32, i32) {
    %c0_i32 = arith.constant 0 : i32
    %c0_i32_0 = arith.constant 0 : i32
    return %arg0, %c0_i32 : i32, i32
  }
}

</mosaic_0001>

<llo_original>
// kernel: conv1x1.1
$region0: #{conv1x1.1}
  #allocation0 [shape = 'u32[]', space=smem, size = 0x4, offset = 0x4, fixed_abs, tag = 'smem constant byte address 0x4 - core index']
  #allocation1 [shape = 'u32[144,128]{1,0:T(1,128)}', space=vmem, size = 0x12000, scoped, tag = 'internal scratch']
  %s0 = inlined_call_operand.vmem [shape: f32[8,2304], index: 0, kind: input, shape index: {}]
  %s1 = inlined_call_operand.hbm [shape: f32[2304,128], index: 1, kind: input, shape index: {}]
  %s2 = inlined_call_operand.hbm [shape: f32[1,128], index: 2, kind: input, shape index: {}]
  %s3 = inlined_call_operand.vmem [shape: f32[8,128], index: 3, kind: output, shape index: {}]
  %s4 = sld [smem:[#allocation0]]
  $region30: #{conv1x1.1} parent=0
    _
  %s6 = ssub.s32 1, %s4
  %s7 = scalar_select 0, %s6, %s4
  $region1: #{conv1x1.1} parent=0
    #allocation2 [shape = 'u8[1179648]{0}', space=vmem, size = 0x120000, scoped, tag = 'input window, operand 1, single buffered']
    #allocation3 [shape = 's32[1]{0}', space=sflag, size = 0x4, scoped, tag = 'scoped memory for conv1x1.1']
    #allocation4 [shape = 'u8[512]{0}', space=vmem, size = 0x400, scoped, tag = 'input window, operand 2, single buffered']
    #allocation5 [shape = 's32[1]{0}', space=sflag, size = 0x4, scoped, tag = 'scoped memory for conv1x1.1']
    %8 = vsyncpa [#allocation3], 0
    %9 = vsyncpa [#allocation5], 0
    // Predicated region
    $region2: #{conv1x1.1} parent=1 // pred_check
      _
    $region3: #{conv1x1.1} parent=1 // pred_check_branch
      %11 = sbr.rel (0) target = $region5
    $region4: #{conv1x1.1} parent=1 // pred_region
      _
    $region5: #{conv1x1.1} parent=1 // pred_fallthru
      _
    // Predicated region
    $region6: #{conv1x1.1} parent=1 // pred_check
      _
    $region7: #{conv1x1.1} parent=1 // pred_check_branch
      %13 = sbr.rel (0) target = $region9
    $region8: #{conv1x1.1} parent=1 // pred_region
      %s15 = ssub.s32 36864, 36864
      %16 = vsyncadd [#allocation3], %s15
      %s17 = sshll.u32 [#allocation2], 4
      %s18 = int_to_ptr.vmem [resolvable:$true] %s17
      %23 = dma.hbm_to_vmem [thread:$0]  %s1, 36864, %s18, [#allocation3], 128, 128, 8
    $region9: #{conv1x1.1} parent=1 // pred_fallthru
      _
    // Predicated region
    $region10: #{conv1x1.1} parent=1 // pred_check
      _
    $region11: #{conv1x1.1} parent=1 // pred_check_branch
      %25 = sbr.rel (0) target = $region13
    $region12: #{conv1x1.1} parent=1 // pred_region
      %s27 = ssub.s32 16, 16
      %28 = vsyncadd [#allocation5], %s27
      %s30 = sshll.u32 [#allocation4], 4
      %s31 = int_to_ptr.vmem [resolvable:$true] %s30
      %33 = dma.hbm_to_vmem [thread:$0]  %s2, 16, %s31, [#allocation5]
    $region13: #{conv1x1.1} parent=1 // pred_fallthru
      _
    // Predicated region
    $region14: #{conv1x1.1} parent=1 // pred_check
      _
    $region15: #{conv1x1.1} parent=1 // pred_check_branch
      %35 = sbr.rel (0) target = $region17
    $region16: #{conv1x1.1} parent=1 // pred_region
      %36 = dma.done [#allocation3], 36864
    $region17: #{conv1x1.1} parent=1 // pred_fallthru
      _
    // Predicated region
    $region18: #{conv1x1.1} parent=1 // pred_check
      _
    $region19: #{conv1x1.1} parent=1 // pred_check_branch
      %38 = sbr.rel (0) target = $region21
    $region20: #{conv1x1.1} parent=1 // pred_region
      %39 = dma.done [#allocation5], 16
    $region21: #{conv1x1.1} parent=1 // pred_fallthru
      _
    %v40 = vld [vmem:[%s0] sm:$0xff]
    %v41 = vld [vmem:[%s0 + $0x8] sm:$0xff]
    %v42 = vld [vmem:[%s0 + $0x10] sm:$0xff]
    %v43 = vld [vmem:[%s0 + $0x18] sm:$0xff]
    %v44 = vld [vmem:[%s0 + $0x20] sm:$0xff]
    %v45 = vld [vmem:[%s0 + $0x28] sm:$0xff]
    %v46 = vld [vmem:[%s0 + $0x30] sm:$0xff]
    %v47 = vld [vmem:[%s0 + $0x38] sm:$0xff]
    %v48 = vld [vmem:[%s0 + $0x40] sm:$0xff]
    %v49 = vld [vmem:[%s0 + $0x48] sm:$0xff]
    %v50 = vld [vmem:[%s0 + $0x50] sm:$0xff]
    %v51 = vld [vmem:[%s0 + $0x58] sm:$0xff]
    %v52 = vld [vmem:[%s0 + $0x60] sm:$0xff]
    %v53 = vld [vmem:[%s0 + $0x68] sm:$0xff]
    %v54 = vld [vmem:[%s0 + $0x70] sm:$0xff]
    %v55 = vld [vmem:[%s0 + $0x78] sm:$0xff]
    %v56 = vld [vmem:[%s0 + $0x80] sm:$0xff]
    %v57 = vld [vmem:[%s0 + $0x88] sm:$0xff]
    %v58 = vld [vmem:[#allocation2] sm:$0xff]
    %v59 = vld [vmem:[#allocation2 + $0x8] sm:$0xff]
    %v60 = vld [vmem:[#allocation2 + $0x10] sm:$0xff]
    %v61 = vld [vmem:[#allocation2 + $0x18] sm:$0xff]
    %v62 = vld [vmem:[#allocation2 + $0x20] sm:$0xff]
    %v63 = vld [vmem:[#allocation2 + $0x28] sm:$0xff]
    %v64 = vld [vmem:[#allocation2 + $0x30] sm:$0xff]
    %v65 = vld [vmem:[#allocation2 + $0x38] sm:$0xff]
    %v66 = vld [vmem:[#allocation2 + $0x40] sm:$0xff]
    %v67 = vld [vmem:[#allocation2 + $0x48] sm:$0xff]
    %v68 = vld [vmem:[#allocation2 + $0x50] sm:$0xff]
    %v69 = vld [vmem:[#allocation2 + $0x58] sm:$0xff]
    %v70 = vld [vmem:[#allocation2 + $0x60] sm:$0xff]
    %v71 = vld [vmem:[#allocation2 + $0x68] sm:$0xff]
    %v72 = vld [vmem:[#allocation2 + $0x70] sm:$0xff]
    %v73 = vld [vmem:[#allocation2 + $0x78] sm:$0xff]
    %v74 = vld [vmem:[#allocation2 + $0x80] sm:$0xff]
    %v75 = vld [vmem:[#allocation2 + $0x88] sm:$0xff]
    %v76 = vld [vmem:[#allocation2 + $0x90] sm:$0xff]
    %v77 = vld [vmem:[#allocation2 + $0x98] sm:$0xff]
    %v78 = vld [vmem:[#allocation2 + $0xa0] sm:$0xff]
    %v79 = vld [vmem:[#allocation2 + $0xa8] sm:$0xff]
    %v80 = vld [vmem:[#allocation2 + $0xb0] sm:$0xff]
    %v81 = vld [vmem:[#allocation2 + $0xb8] sm:$0xff]
    %v82 = vld [vmem:[#allocation2 + $0xc0] sm:$0xff]
    %v83 = vld [vmem:[#allocation2 + $0xc8] sm:$0xff]
    %v84 = vld [vmem:[#allocation2 + $0xd0] sm:$0xff]
    %v85 = vld [vmem:[#allocation2 + $0xd8] sm:$0xff]
    %v86 = vld [vmem:[#allocation2 + $0xe0] sm:$0xff]
    %v87 = vld [vmem:[#allocation2 + $0xe8] sm:$0xff]
    %v88 = vld [vmem:[#allocation2 + $0xf0] sm:$0xff]
    %v89 = vld [vmem:[#allocation2 + $0xf8] sm:$0xff]
    %v90 = vld [vmem:[#allocation2 + $0x100] sm:$0xff]
    %v91 = vld [vmem:[#allocation2 + $0x108] sm:$0xff]
    %v92 = vld [vmem:[#allocation2 + $0x110] sm:$0xff]
    %v93 = vld [vmem:[#allocation2 + $0x118] sm:$0xff]
    %v94 = vld [vmem:[#allocation2 + $0x120] sm:$0xff]
    %v95 = vld [vmem:[#allocation2 + $0x128] sm:$0xff]
    %v96 = vld [vmem:[#allocation2 + $0x130] sm:$0xff]
    %v97 = vld [vmem:[#allocation2 + $0x138] sm:$0xff]
    %v98 = vld [vmem:[#allocation2 + $0x140] sm:$0xff]
    %v99 = vld [vmem:[#allocation2 + $0x148] sm:$0xff]
    %v100 = vld [vmem:[#allocation2 + $0x150] sm:$0xff]
    %v101 = vld [vmem:[#allocation2 + $0x158] sm:$0xff]
    %v102 = vld [vmem:[#allocation2 + $0x160] sm:$0xff]
    %v103 = vld [vmem:[#allocation2 + $0x168] sm:$0xff]
    %v104 = vld [vmem:[#allocation2 + $0x170] sm:$0xff]
    %v105 = vld [vmem:[#allocation2 + $0x178] sm:$0xff]
    %v106 = vld [vmem:[#allocation2 + $0x180] sm:$0xff]
    %v107 = vld [vmem:[#allocation2 + $0x188] sm:$0xff]
    %v108 = vld [vmem:[#allocation2 + $0x190] sm:$0xff]
    %v109 = vld [vmem:[#allocation2 + $0x198] sm:$0xff]
    %v110 = vld [vmem:[#allocation2 + $0x1a0] sm:$0xff]
    %v111 = vld [vmem:[#allocation2 + $0x1a8] sm:$0xff]
    %v112 = vld [vmem:[#allocation2 + $0x1b0] sm:$0xff]
    %v113 = vld [vmem:[#allocation2 + $0x1b8] sm:$0xff]
    %v114 = vld [vmem:[#allocation2 + $0x1c0] sm:$0xff]
    %v115 = vld [vmem:[#allocation2 + $0x1c8] sm:$0xff]
    %v116 = vld [vmem:[#allocation2 + $0x1d0] sm:$0xff]
    %v117 = vld [vmem:[#allocation2 + $0x1d8] sm:$0xff]
    %v118 = vld [vmem:[#allocation2 + $0x1e0] sm:$0xff]
    %v119 = vld [vmem:[#allocation2 + $0x1e8] sm:$0xff]
    %v120 = vld [vmem:[#allocation2 + $0x1f0] sm:$0xff]
    %v121 = vld [vmem:[#allocation2 + $0x1f8] sm:$0xff]
    %v122 = vld [vmem:[#allocation2 + $0x200] sm:$0xff]
    %v123 = vld [vmem:[#allocation2 + $0x208] sm:$0xff]
    %v124 = vld [vmem:[#allocation2 + $0x210] sm:$0xff]
    %v125 = vld [vmem:[#allocation2 + $0x218] sm:$0xff]
    %v126 = vld [vmem:[#allocation2 + $0x220] sm:$0xff]
    %v127 = vld [vmem:[#allocation2 + $0x228] sm:$0xff]
    %v128 = vld [vmem:[#allocation2 + $0x230] sm:$0xff]
    %v129 = vld [vmem:[#allocation2 + $0x238] sm:$0xff]
    %v130 = vld [vmem:[#allocation2 + $0x240] sm:$0xff]
    %v131 = vld [vmem:[#allocation2 + $0x248] sm:$0xff]
    %v132 = vld [vmem:[#allocation2 + $0x250] sm:$0xff]
    %v133 = vld [vmem:[#allocation2 + $0x258] sm:$0xff]
    %v134 = vld [vmem:[#allocation2 + $0x260] sm:$0xff]
    %v135 = vld [vmem:[#allocation2 + $0x268] sm:$0xff]
    %v136 = vld [vmem:[#allocation2 + $0x270] sm:$0xff]
    %v137 = vld [vmem:[#allocation2 + $0x278] sm:$0xff]
    %v138 = vld [vmem:[#allocation2 + $0x280] sm:$0xff]
    %v139 = vld [vmem:[#allocation2 + $0x288] sm:$0xff]
    %v140 = vld [vmem:[#allocation2 + $0x290] sm:$0xff]
    %v141 = vld [vmem:[#allocation2 + $0x298] sm:$0xff]
    %v142 = vld [vmem:[#allocation2 + $0x2a0] sm:$0xff]
    %v143 = vld [vmem:[#allocation2 + $0x2a8] sm:$0xff]
    %v144 = vld [vmem:[#allocation2 + $0x2b0] sm:$0xff]
    %v145 = vld [vmem:[#allocation2 + $0x2b8] sm:$0xff]
    %v146 = vld [vmem:[#allocation2 + $0x2c0] sm:$0xff]
    %v147 = vld [vmem:[#allocation2 + $0x2c8] sm:$0xff]
    %v148 = vld [vmem:[#allocation2 + $0x2d0] sm:$0xff]
    %v149 = vld [vmem:[#allocation2 + $0x2d8] sm:$0xff]
    %v150 = vld [vmem:[#allocation2 + $0x2e0] sm:$0xff]
    %v151 = vld [vmem:[#allocation2 + $0x2e8] sm:$0xff]
    %v152 = vld [vmem:[#allocation2 + $0x2f0] sm:$0xff]
    %v153 = vld [vmem:[#allocation2 + $0x2f8] sm:$0xff]
    %v154 = vld [vmem:[#allocation2 + $0x300] sm:$0xff]
    %v155 = vld [vmem:[#allocation2 + $0x308] sm:$0xff]
    %v156 = vld [vmem:[#allocation2 + $0x310] sm:$0xff]
    %v157 = vld [vmem:[#allocation2 + $0x318] sm:$0xff]
    %v158 = vld [vmem:[#allocation2 + $0x320] sm:$0xff]
    %v159 = vld [vmem:[#allocation2 + $0x328] sm:$0xff]
    %v160 = vld [vmem:[#allocation2 + $0x330] sm:$0xff]
    %v161 = vld [vmem:[#allocation2 + $0x338] sm:$0xff]
    %v162 = vld [vmem:[#allocation2 + $0x340] sm:$0xff]
    %v163 = vld [vmem:[#allocation2 + $0x348] sm:$0xff]
    %v164 = vld [vmem:[#allocation2 + $0x350] sm:$0xff]
    %v165 = vld [vmem:[#allocation2 + $0x358] sm:$0xff]
    %v166 = vld [vmem:[#allocation2 + $0x360] sm:$0xff]
    %v167 = vld [vmem:[#allocation2 + $0x368] sm:$0xff]
    %v168 = vld [vmem:[#allocation2 + $0x370] sm:$0xff]
    %v169 = vld [vmem:[#allocation2 + $0x378] sm:$0xff]
    %v170 = vld [vmem:[#allocation2 + $0x380] sm:$0xff]
    %v171 = vld [vmem:[#allocation2 + $0x388] sm:$0xff]
    %v172 = vld [vmem:[#allocation2 + $0x390] sm:$0xff]
    %v173 = vld [vmem:[#allocation2 + $0x398] sm:$0xff]
    %v174 = vld [vmem:[#allocation2 + $0x3a0] sm:$0xff]
    %v175 = vld [vmem:[#allocation2 + $0x3a8] sm:$0xff]
    %v176 = vld [vmem:[#allocation2 + $0x3b0] sm:$0xff]
    %v177 = vld [vmem:[#allocation2 + $0x3b8] sm:$0xff]
    %v178 = vld [vmem:[#allocation2 + $0x3c0] sm:$0xff]
    %v179 = vld [vmem:[#allocation2 + $0x3c8] sm:$0xff]
    %v180 = vld [vmem:[#allocation2 + $0x3d0] sm:$0xff]
    %v181 = vld [vmem:[#allocation2 + $0x3d8] sm:$0xff]
    %v182 = vld [vmem:[#allocation2 + $0x3e0] sm:$0xff]
    %v183 = vld [vmem:[#allocation2 + $0x3e8] sm:$0xff]
    %v184 = vld [vmem:[#allocation2 + $0x3f0] sm:$0xff]
    %v185 = vld [vmem:[#allocation2 + $0x3f8] sm:$0xff]
    %v186 = vld [vmem:[#allocation2 + $0x400] sm:$0xff]
    %v187 = vld [vmem:[#allocation2 + $0x408] sm:$0xff]
    %v188 = vld [vmem:[#allocation2 + $0x410] sm:$0xff]
    %v189 = vld [vmem:[#allocation2 + $0x418] sm:$0xff]
    %v190 = vld [vmem:[#allocation2 + $0x420] sm:$0xff]
    %v191 = vld [vmem:[#allocation2 + $0x428] sm:$0xff]
    %v192 = vld [vmem:[#allocation2 + $0x430] sm:$0xff]
    %v193 = vld [vmem:[#allocation2 + $0x438] sm:$0xff]
    %v194 = vld [vmem:[#allocation2 + $0x440] sm:$0xff]
    %v195 = vld [vmem:[#allocation2 + $0x448] sm:$0xff]
    %v196 = vld [vmem:[#allocation2 + $0x450] sm:$0xff]
    %v197 = vld [vmem:[#allocation2 + $0x458] sm:$0xff]
    %v198 = vld [vmem:[#allocation2 + $0x460] sm:$0xff]
    %v199 = vld [vmem:[#allocation2 + $0x468] sm:$0xff]
    %v200 = vld [vmem:[#allocation2 + $0x470] sm:$0xff]
    %v201 = vld [vmem:[#allocation2 + $0x478] sm:$0xff]
    %v202 = vld [vmem:[#allocation2 + $0x480] sm:$0xff]
    %v203 = vld [vmem:[#allocation2 + $0x488] sm:$0xff]
    %v204 = vld [vmem:[#allocation2 + $0x490] sm:$0xff]
    %v205 = vld [vmem:[#allocation2 + $0x498] sm:$0xff]
    %v206 = vld [vmem:[#allocation2 + $0x4a0] sm:$0xff]
    %v207 = vld [vmem:[#allocation2 + $0x4a8] sm:$0xff]
    %v208 = vld [vmem:[#allocation2 + $0x4b0] sm:$0xff]
    %v209 = vld [vmem:[#allocation2 + $0x4b8] sm:$0xff]
    %v210 = vld [vmem:[#allocation2 + $0x4c0] sm:$0xff]
    %v211 = vld [vmem:[#allocation2 + $0x4c8] sm:$0xff]
    %v212 = vld [vmem:[#allocation2 + $0x4d0] sm:$0xff]
    %v213 = vld [vmem:[#allocation2 + $0x4d8] sm:$0xff]
    %v214 = vld [vmem:[#allocation2 + $0x4e0] sm:$0xff]
    %v215 = vld [vmem:[#allocation2 + $0x4e8] sm:$0xff]
    %v216 = vld [vmem:[#allocation2 + $0x4f0] sm:$0xff]
    %v217 = vld [vmem:[#allocation2 + $0x4f8] sm:$0xff]
    %v218 = vld [vmem:[#allocation2 + $0x500] sm:$0xff]
    %v219 = vld [vmem:[#allocation2 + $0x508] sm:$0xff]
    %v220 = vld [vmem:[#allocation2 + $0x510] sm:$0xff]
    %v221 = vld [vmem:[#allocation2 + $0x518] sm:$0xff]
    %v222 = vld [vmem:[#allocation2 + $0x520] sm:$0xff]
    %v223 = vld [vmem:[#allocation2 + $0x528] sm:$0xff]
    %v224 = vld [vmem:[#allocation2 + $0x530] sm:$0xff]
    %v225 = vld [vmem:[#allocation2 + $0x538] sm:$0xff]
    %v226 = vld [vmem:[#allocation2 + $0x540] sm:$0xff]
    %v227 = vld [vmem:[#allocation2 + $0x548] sm:$0xff]
    %v228 = vld [vmem:[#allocation2 + $0x550] sm:$0xff]
    %v229 = vld [vmem:[#allocation2 + $0x558] sm:$0xff]
    %v230 = vld [vmem:[#allocation2 + $0x560] sm:$0xff]
    %v231 = vld [vmem:[#allocation2 + $0x568] sm:$0xff]
    %v232 = vld [vmem:[#allocation2 + $0x570] sm:$0xff]
    %v233 = vld [vmem:[#allocation2 + $0x578] sm:$0xff]
    %v234 = vld [vmem:[#allocation2 + $0x580] sm:$0xff]
    %v235 = vld [vmem:[#allocation2 + $0x588] sm:$0xff]
    %v236 = vld [vmem:[#allocation2 + $0x590] sm:$0xff]
    %v237 = vld [vmem:[#allocation2 + $0x598] sm:$0xff]
    %v238 = vld [vmem:[#allocation2 + $0x5a0] sm:$0xff]
    %v239 = vld [vmem:[#allocation2 + $0x5a8] sm:$0xff]
    %v240 = vld [vmem:[#allocation2 + $0x5b0] sm:$0xff]
    %v241 = vld [vmem:[#allocation2 + $0x5b8] sm:$0xff]
    %v242 = vld [vmem:[#allocation2 + $0x5c0] sm:$0xff]
    %v243 = vld [vmem:[#allocation2 + $0x5c8] sm:$0xff]
    %v244 = vld [vmem:[#allocation2 + $0x5d0] sm:$0xff]
    %v245 = vld [vmem:[#allocation2 + $0x5d8] sm:$0xff]
    %v246 = vld [vmem:[#allocation2 + $0x5e0] sm:$0xff]
    %v247 = vld [vmem:[#allocation2 + $0x5e8] sm:$0xff]
    %v248 = vld [vmem:[#allocation2 + $0x5f0] sm:$0xff]
    %v249 = vld [vmem:[#allocation2 + $0x5f8] sm:$0xff]
    %v250 = vld [vmem:[#allocation2 + $0x600] sm:$0xff]
    %v251 = vld [vmem:[#allocation2 + $0x608] sm:$0xff]
    %v252 = vld [vmem:[#allocation2 + $0x610] sm:$0xff]
    %v253 = vld [vmem:[#allocation2 + $0x618] sm:$0xff]
    %v254 = vld [vmem:[#allocation2 + $0x620] sm:$0xff]
    %v255 = vld [vmem:[#allocation2 + $0x628] sm:$0xff]
    %v256 = vld [vmem:[#allocation2 + $0x630] sm:$0xff]
    %v257 = vld [vmem:[#allocation2 + $0x638] sm:$0xff]
    %v258 = vld [vmem:[#allocation2 + $0x640] sm:$0xff]
    %v259 = vld [vmem:[#allocation2 + $0x648] sm:$0xff]
    %v260 = vld [vmem:[#allocation2 + $0x650] sm:$0xff]
    %v261 = vld [vmem:[#allocation2 + $0x658] sm:$0xff]
    %v262 = vld [vmem:[#allocation2 + $0x660] sm:$0xff]
    %v263 = vld [vmem:[#allocation2 + $0x668] sm:$0xff]
    %v264 = vld [vmem:[#allocation2 + $0x670] sm:$0xff]
    %v265 = vld [vmem:[#allocation2 + $0x678] sm:$0xff]
    %v266 = vld [vmem:[#allocation2 + $0x680] sm:$0xff]
    %v267 = vld [vmem:[#allocation2 + $0x688] sm:$0xff]
    %v268 = vld [vmem:[#allocation2 + $0x690] sm:$0xff]
    %v269 = vld [vmem:[#allocation2 + $0x698] sm:$0xff]
    %v270 = vld [vmem:[#allocation2 + $0x6a0] sm:$0xff]
    %v271 = vld [vmem:[#allocation2 + $0x6a8] sm:$0xff]
    %v272 = vld [vmem:[#allocation2 + $0x6b0] sm:$0xff]
    %v273 = vld [vmem:[#allocation2 + $0x6b8] sm:$0xff]
    %v274 = vld [vmem:[#allocation2 + $0x6c0] sm:$0xff]
    %v275 = vld [vmem:[#allocation2 + $0x6c8] sm:$0xff]
    %v276 = vld [vmem:[#allocation2 + $0x6d0] sm:$0xff]
    %v277 = vld [vmem:[#allocation2 + $0x6d8] sm:$0xff]
    %v278 = vld [vmem:[#allocation2 + $0x6e0] sm:$0xff]
    %v279 = vld [vmem:[#allocation2 + $0x6e8] sm:$0xff]
    %v280 = vld [vmem:[#allocation2 + $0x6f0] sm:$0xff]
    %v281 = vld [vmem:[#allocation2 + $0x6f8] sm:$0xff]
    %v282 = vld [vmem:[#allocation2 + $0x700] sm:$0xff]
    %v283 = vld [vmem:[#allocation2 + $0x708] sm:$0xff]
    %v284 = vld [vmem:[#allocation2 + $0x710] sm:$0xff]
    %v285 = vld [vmem:[#allocation2 + $0x718] sm:$0xff]
    %v286 = vld [vmem:[#allocation2 + $0x720] sm:$0xff]
    %v287 = vld [vmem:[#allocation2 + $0x728] sm:$0xff]
    %v288 = vld [vmem:[#allocation2 + $0x730] sm:$0xff]
    %v289 = vld [vmem:[#allocation2 + $0x738] sm:$0xff]
    %v290 = vld [vmem:[#allocation2 + $0x740] sm:$0xff]
    %v291 = vld [vmem:[#allocation2 + $0x748] sm:$0xff]
    %v292 = vld [vmem:[#allocation2 + $0x750] sm:$0xff]
    %v293 = vld [vmem:[#allocation2 + $0x758] sm:$0xff]
    %v294 = vld [vmem:[#allocation2 + $0x760] sm:$0xff]
    %v295 = vld [vmem:[#allocation2 + $0x768] sm:$0xff]
    %v296 = vld [vmem:[#allocation2 + $0x770] sm:$0xff]
    %v297 = vld [vmem:[#allocation2 + $0x778] sm:$0xff]
    %v298 = vld [vmem:[#allocation2 + $0x780] sm:$0xff]
    %v299 = vld [vmem:[#allocation2 + $0x788] sm:$0xff]
    %v300 = vld [vmem:[#allocation2 + $0x790] sm:$0xff]
    %v301 = vld [vmem:[#allocation2 + $0x798] sm:$0xff]
    %v302 = vld [vmem:[#allocation2 + $0x7a0] sm:$0xff]
    %v303 = vld [vmem:[#allocation2 + $0x7a8] sm:$0xff]
    %v304 = vld [vmem:[#allocation2 + $0x7b0] sm:$0xff]
    %v305 = vld [vmem:[#allocation2 + $0x7b8] sm:$0xff]
    %v306 = vld [vmem:[#allocation2 + $0x7c0] sm:$0xff]
    %v307 = vld [vmem:[#allocation2 + $0x7c8] sm:$0xff]
    %v308 = vld [vmem:[#allocation2 + $0x7d0] sm:$0xff]
    %v309 = vld [vmem:[#allocation2 + $0x7d8] sm:$0xff]
    %v310 = vld [vmem:[#allocation2 + $0x7e0] sm:$0xff]
    %v311 = vld [vmem:[#allocation2 + $0x7e8] sm:$0xff]
    %v312 = vld [vmem:[#allocation2 + $0x7f0] sm:$0xff]
    %v313 = vld [vmem:[#allocation2 + $0x7f8] sm:$0xff]
    %v314 = vld [vmem:[#allocation2 + $0x800] sm:$0xff]
    %v315 = vld [vmem:[#allocation2 + $0x808] sm:$0xff]
    %v316 = vld [vmem:[#allocation2 + $0x810] sm:$0xff]
    %v317 = vld [vmem:[#allocation2 + $0x818] sm:$0xff]
    %v318 = vld [vmem:[#allocation2 + $0x820] sm:$0xff]
    %v319 = vld [vmem:[#allocation2 + $0x828] sm:$0xff]
    %v320 = vld [vmem:[#allocation2 + $0x830] sm:$0xff]
    %v321 = vld [vmem:[#allocation2 + $0x838] sm:$0xff]
    %v322 = vld [vmem:[#allocation2 + $0x840] sm:$0xff]
    %v323 = vld [vmem:[#allocation2 + $0x848] sm:$0xff]
    %v324 = vld [vmem:[#allocation2 + $0x850] sm:$0xff]
    %v325 = vld [vmem:[#allocation2 + $0x858] sm:$0xff]
    %v326 = vld [vmem:[#allocation2 + $0x860] sm:$0xff]
    %v327 = vld [vmem:[#allocation2 + $0x868] sm:$0xff]
    %v328 = vld [vmem:[#allocation2 + $0x870] sm:$0xff]
    %v329 = vld [vmem:[#allocation2 + $0x878] sm:$0xff]
    %v330 = vld [vmem:[#allocation2 + $0x880] sm:$0xff]
    %v331 = vld [vmem:[#allocation2 + $0x888] sm:$0xff]
    %v332 = vld [vmem:[#allocation2 + $0x890] sm:$0xff]
    %v333 = vld [vmem:[#allocation2 + $0x898] sm:$0xff]
    %v334 = vld [vmem:[#allocation2 + $0x8a0] sm:$0xff]
    %v335 = vld [vmem:[#allocation2 + $0x8a8] sm:$0xff]
    %v336 = vld [vmem:[#allocation2 + $0x8b0] sm:$0xff]
    %v337 = vld [vmem:[#allocation2 + $0x8b8] sm:$0xff]
    %v338 = vld [vmem:[#allocation2 + $0x8c0] sm:$0xff]
    %v339 = vld [vmem:[#allocation2 + $0x8c8] sm:$0xff]
    %v340 = vld [vmem:[#allocation2 + $0x8d0] sm:$0xff]
    %v341 = vld [vmem:[#allocation2 + $0x8d8] sm:$0xff]
    %v342 = vld [vmem:[#allocation2 + $0x8e0] sm:$0xff]
    %v343 = vld [vmem:[#allocation2 + $0x8e8] sm:$0xff]
    %v344 = vld [vmem:[#allocation2 + $0x8f0] sm:$0xff]
    %v345 = vld [vmem:[#allocation2 + $0x8f8] sm:$0xff]
    %v346 = vld [vmem:[#allocation4] sm:$0x1]
    %v348 = vlaneseq
    %v349 = vshrl.u32 %v348, 7
    %v350 = vsub.s32 0, %v349
    %v351 = vrot.slane %v346, %v350
    %353 = vmatprep.subr.mxu0 0.0
    %354 = vmatpush1.msra.mxu0 %v73
    %355 = vmatprep.subr.mxu0 0.0
    %356 = vmatpush1.msra.mxu0 %v72
    %357 = vmatprep.subr.mxu0 0.0
    %358 = vmatpush1.msra.mxu0 %v71
    %359 = vmatprep.subr.mxu0 0.0
    %360 = vmatpush1.msra.mxu0 %v70
    %361 = vmatprep.subr.mxu0 0.0
    %362 = vmatpush1.msra.mxu0 %v69
    %363 = vmatprep.subr.mxu0 0.0
    %364 = vmatpush1.msra.mxu0 %v68
    %365 = vmatprep.subr.mxu0 0.0
    %366 = vmatpush1.msra.mxu0 %v67
    %367 = vmatprep.subr.mxu0 0.0
    %368 = vmatpush1.msra.mxu0 %v66
    %369 = vmatprep.subr.mxu0 0.0
    %370 = vmatpush1.msra.mxu0 %v65
    %371 = vmatprep.subr.mxu0 0.0
    %372 = vmatpush1.msra.mxu0 %v64
    %373 = vmatprep.subr.mxu0 0.0
    %374 = vmatpush1.msra.mxu0 %v63
    %375 = vmatprep.subr.mxu0 0.0
    %376 = vmatpush1.msra.mxu0 %v62
    %377 = vmatprep.subr.mxu0 0.0
    %378 = vmatpush1.msra.mxu0 %v61
    %379 = vmatprep.subr.mxu0 0.0
    %380 = vmatpush1.msra.mxu0 %v60
    %381 = vmatprep.subr.mxu0 0.0
    %382 = vmatpush1.msra.mxu0 %v59
    %383 = vmatprep.subr.mxu0 0.0
    %384 = vmatpush1.msra.mxu0 %v58
    %385 = vmatprep.subr.mxu0 0.0
    %386 = vmatpush2.msra.mxu0 %v89
    %387 = vmatprep.subr.mxu0 0.0
    %388 = vmatpush2.msra.mxu0 %v88
    %389 = vmatprep.subr.mxu0 0.0
    %390 = vmatpush2.msra.mxu0 %v87
    %391 = vmatprep.subr.mxu0 0.0
    %392 = vmatpush2.msra.mxu0 %v86
    %393 = vmatprep.subr.mxu0 0.0
    %394 = vmatpush2.msra.mxu0 %v85
    %395 = vmatprep.subr.mxu0 0.0
    %396 = vmatpush2.msra.mxu0 %v84
    %397 = vmatprep.subr.mxu0 0.0
    %398 = vmatpush2.msra.mxu0 %v83
    %399 = vmatprep.subr.mxu0 0.0
    %400 = vmatpush2.msra.mxu0 %v82
    %401 = vmatprep.subr.mxu0 0.0
    %402 = vmatpush2.msra.mxu0 %v81
    %403 = vmatprep.subr.mxu0 0.0
    %404 = vmatpush2.msra.mxu0 %v80
    %405 = vmatprep.subr.mxu0 0.0
    %406 = vmatpush2.msra.mxu0 %v79
    %407 = vmatprep.subr.mxu0 0.0
    %408 = vmatpush2.msra.mxu0 %v78
    %409 = vmatprep.subr.mxu0 0.0
    %410 = vmatpush2.msra.mxu0 %v77
    %411 = vmatprep.subr.mxu0 0.0
    %412 = vmatpush2.msra.mxu0 %v76
    %413 = vmatprep.subr.mxu0 0.0
    %414 = vmatpush2.msra.mxu0 %v75
    %415 = vmatprep.subr.mxu0 0.0
    %416 = vmatpush2.msra.mxu0 %v74
    %417 = vmatprep.mubr.f32.mxu0 %v41
    %418 = vmatmul.mubr.f32.gmra.mxu0 %v40
    %v419 = vpop.f32.mrf.mxu0
    %v420 = vadd.f32 %v351, %v419
    %v421 = vpop.f32.mrf.mxu0
    %422 = vdwg.mxu0
    %423 = vmatprep.subr.mxu0 0.0
    %424 = vmatpush1.msra.mxu0 %v105
    %425 = vmatprep.subr.mxu0 0.0
    %426 = vmatpush1.msra.mxu0 %v104
    %427 = vmatprep.subr.mxu0 0.0
    %428 = vmatpush1.msra.mxu0 %v103
    %429 = vmatprep.subr.mxu0 0.0
    %430 = vmatpush1.msra.mxu0 %v102
    %431 = vmatprep.subr.mxu0 0.0
    %432 = vmatpush1.msra.mxu0 %v101
    %433 = vmatprep.subr.mxu0 0.0
    %434 = vmatpush1.msra.mxu0 %v100
    %435 = vmatprep.subr.mxu0 0.0
    %436 = vmatpush1.msra.mxu0 %v99
    %437 = vmatprep.subr.mxu0 0.0
    %438 = vmatpush1.msra.mxu0 %v98
    %439 = vmatprep.subr.mxu0 0.0
    %440 = vmatpush1.msra.mxu0 %v97
    %441 = vmatprep.subr.mxu0 0.0
    %442 = vmatpush1.msra.mxu0 %v96
    %443 = vmatprep.subr.mxu0 0.0
    %444 = vmatpush1.msra.mxu0 %v95
    %445 = vmatprep.subr.mxu0 0.0
    %446 = vmatpush1.msra.mxu0 %v94
    %447 = vmatprep.subr.mxu0 0.0
    %448 = vmatpush1.msra.mxu0 %v93
    %449 = vmatprep.subr.mxu0 0.0
    %450 = vmatpush1.msra.mxu0 %v92
    %451 = vmatprep.subr.mxu0 0.0
    %452 = vmatpush1.msra.mxu0 %v91
    %453 = vmatprep.subr.mxu0 0.0
    %454 = vmatpush1.msra.mxu0 %v90
    %455 = vmatprep.subr.mxu0 0.0
    %456 = vmatpush2.msra.mxu0 %v121
    %457 = vmatprep.subr.mxu0 0.0
    %458 = vmatpush2.msra.mxu0 %v120
    %459 = vmatprep.subr.mxu0 0.0
    %460 = vmatpush2.msra.mxu0 %v119
    %461 = vmatprep.subr.mxu0 0.0
    %462 = vmatpush2.msra.mxu0 %v118
    %463 = vmatprep.subr.mxu0 0.0
    %464 = vmatpush2.msra.mxu0 %v117
    %465 = vmatprep.subr.mxu0 0.0
    %466 = vmatpush2.msra.mxu0 %v116
    %467 = vmatprep.subr.mxu0 0.0
    %468 = vmatpush2.msra.mxu0 %v115
    %469 = vmatprep.subr.mxu0 0.0
    %470 = vmatpush2.msra.mxu0 %v114
    %471 = vmatprep.subr.mxu0 0.0
    %472 = vmatpush2.msra.mxu0 %v113
    %473 = vmatprep.subr.mxu0 0.0
    %474 = vmatpush2.msra.mxu0 %v112
    %475 = vmatprep.subr.mxu0 0.0
    %476 = vmatpush2.msra.mxu0 %v111
    %477 = vmatprep.subr.mxu0 0.0
    %478 = vmatpush2.msra.mxu0 %v110
    %479 = vmatprep.subr.mxu0 0.0
    %480 = vmatpush2.msra.mxu0 %v109
    %481 = vmatprep.subr.mxu0 0.0
    %482 = vmatpush2.msra.mxu0 %v108
    %483 = vmatprep.subr.mxu0 0.0
    %484 = vmatpush2.msra.mxu0 %v107
    %485 = vmatprep.subr.mxu0 0.0
    %486 = vmatpush2.msra.mxu0 %v106
    %487 = vmatprep.mubr.f32.mxu0 %v43
    %488 = vmatmul.mubr.f32.gmra.mxu0 %v42
    %v489 = vpop.f32.mrf.mxu0
    %v490 = vadd.f32 %v420, %v489
    %v491 = vpop.f32.mrf.mxu0
    %492 = vdwg.mxu0
    %493 = vmatprep.subr.mxu0 0.0
    %494 = vmatpush1.msra.mxu0 %v137
    %495 = vmatprep.subr.mxu0 0.0
    %496 = vmatpush1.msra.mxu0 %v136
    %497 = vmatprep.subr.mxu0 0.0
    %498 = vmatpush1.msra.mxu0 %v135
    %499 = vmatprep.subr.mxu0 0.0
    %500 = vmatpush1.msra.mxu0 %v134
    %501 = vmatprep.subr.mxu0 0.0
    %502 = vmatpush1.msra.mxu0 %v133
    %503 = vmatprep.subr.mxu0 0.0
    %504 = vmatpush1.msra.mxu0 %v132
    %505 = vmatprep.subr.mxu0 0.0
    %506 = vmatpush1.msra.mxu0 %v131
    %507 = vmatprep.subr.mxu0 0.0
    %508 = vmatpush1.msra.mxu0 %v130
    %509 = vmatprep.subr.mxu0 0.0
    %510 = vmatpush1.msra.mxu0 %v129
    %511 = vmatprep.subr.mxu0 0.0
    %512 = vmatpush1.msra.mxu0 %v128
    %513 = vmatprep.subr.mxu0 0.0
    %514 = vmatpush1.msra.mxu0 %v127
    %515 = vmatprep.subr.mxu0 0.0
    %516 = vmatpush1.msra.mxu0 %v126
    %517 = vmatprep.subr.mxu0 0.0
    %518 = vmatpush1.msra.mxu0 %v125
    %519 = vmatprep.subr.mxu0 0.0
    %520 = vmatpush1.msra.mxu0 %v124
    %521 = vmatprep.subr.mxu0 0.0
    %522 = vmatpush1.msra.mxu0 %v123
    %523 = vmatprep.subr.mxu0 0.0
    %524 = vmatpush1.msra.mxu0 %v122
    %525 = vmatprep.subr.mxu0 0.0
    %526 = vmatpush2.msra.mxu0 %v153
    %527 = vmatprep.subr.mxu0 0.0
    %528 = vmatpush2.msra.mxu0 %v152
    %529 = vmatprep.subr.mxu0 0.0
    %530 = vmatpush2.msra.mxu0 %v151
    %531 = vmatprep.subr.mxu0 0.0
    %532 = vmatpush2.msra.mxu0 %v150
    %533 = vmatprep.subr.mxu0 0.0
    %534 = vmatpush2.msra.mxu0 %v149
    %535 = vmatprep.subr.mxu0 0.0
    %536 = vmatpush2.msra.mxu0 %v148
    %537 = vmatprep.subr.mxu0 0.0
    %538 = vmatpush2.msra.mxu0 %v147
    %539 = vmatprep.subr.mxu0 0.0
    %540 = vmatpush2.msra.mxu0 %v146
    %541 = vmatprep.subr.mxu0 0.0
    %542 = vmatpush2.msra.mxu0 %v145
    %543 = vmatprep.subr.mxu0 0.0
    %544 = vmatpush2.msra.mxu0 %v144
    %545 = vmatprep.subr.mxu0 0.0
    %546 = vmatpush2.msra.mxu0 %v143
    %547 = vmatprep.subr.mxu0 0.0
    %548 = vmatpush2.msra.mxu0 %v142
    %549 = vmatprep.subr.mxu0 0.0
    %550 = vmatpush2.msra.mxu0 %v141
    %551 = vmatprep.subr.mxu0 0.0
    %552 = vmatpush2.msra.mxu0 %v140
    %553 = vmatprep.subr.mxu0 0.0
    %554 = vmatpush2.msra.mxu0 %v139
    %555 = vmatprep.subr.mxu0 0.0
    %556 = vmatpush2.msra.mxu0 %v138
    %557 = vmatprep.mubr.f32.mxu0 %v45
    %558 = vmatmul.mubr.f32.gmra.mxu0 %v44
    %v559 = vpop.f32.mrf.mxu0
    %v560 = vadd.f32 %v490, %v559
    %v561 = vpop.f32.mrf.mxu0
    %562 = vdwg.mxu0
    %563 = vmatprep.subr.mxu0 0.0
    %564 = vmatpush1.msra.mxu0 %v169
    %565 = vmatprep.subr.mxu0 0.0
    %566 = vmatpush1.msra.mxu0 %v168
    %567 = vmatprep.subr.mxu0 0.0
    %568 = vmatpush1.msra.mxu0 %v167
    %569 = vmatprep.subr.mxu0 0.0
    %570 = vmatpush1.msra.mxu0 %v166
    %571 = vmatprep.subr.mxu0 0.0
    %572 = vmatpush1.msra.mxu0 %v165
    %573 = vmatprep.subr.mxu0 0.0
    %574 = vmatpush1.msra.mxu0 %v164
    %575 = vmatprep.subr.mxu0 0.0
    %576 = vmatpush1.msra.mxu0 %v163
    %577 = vmatprep.subr.mxu0 0.0
    %578 = vmatpush1.msra.mxu0 %v162
    %579 = vmatprep.subr.mxu0 0.0
    %580 = vmatpush1.msra.mxu0 %v161
    %581 = vmatprep.subr.mxu0 0.0
    %582 = vmatpush1.msra.mxu0 %v160
    %583 = vmatprep.subr.mxu0 0.0
    %584 = vmatpush1.msra.mxu0 %v159
    %585 = vmatprep.subr.mxu0 0.0
    %586 = vmatpush1.msra.mxu0 %v158
    %587 = vmatprep.subr.mxu0 0.0
    %588 = vmatpush1.msra.mxu0 %v157
    %589 = vmatprep.subr.mxu0 0.0
    %590 = vmatpush1.msra.mxu0 %v156
    %591 = vmatprep.subr.mxu0 0.0
    %592 = vmatpush1.msra.mxu0 %v155
    %593 = vmatprep.subr.mxu0 0.0
    %594 = vmatpush1.msra.mxu0 %v154
    %595 = vmatprep.subr.mxu0 0.0
    %596 = vmatpush2.msra.mxu0 %v185
    %597 = vmatprep.subr.mxu0 0.0
    %598 = vmatpush2.msra.mxu0 %v184
    %599 = vmatprep.subr.mxu0 0.0
    %600 = vmatpush2.msra.mxu0 %v183
    %601 = vmatprep.subr.mxu0 0.0
    %602 = vmatpush2.msra.mxu0 %v182
    %603 = vmatprep.subr.mxu0 0.0
    %604 = vmatpush2.msra.mxu0 %v181
    %605 = vmatprep.subr.mxu0 0.0
    %606 = vmatpush2.msra.mxu0 %v180
    %607 = vmatprep.subr.mxu0 0.0
    %608 = vmatpush2.msra.mxu0 %v179
    %609 = vmatprep.subr.mxu0 0.0
    %610 = vmatpush2.msra.mxu0 %v178
    %611 = vmatprep.subr.mxu0 0.0
    %612 = vmatpush2.msra.mxu0 %v177
    %613 = vmatprep.subr.mxu0 0.0
    %614 = vmatpush2.msra.mxu0 %v176
    %615 = vmatprep.subr.mxu0 0.0
    %616 = vmatpush2.msra.mxu0 %v175
    %617 = vmatprep.subr.mxu0 0.0
    %618 = vmatpush2.msra.mxu0 %v174
    %619 = vmatprep.subr.mxu0 0.0
    %620 = vmatpush2.msra.mxu0 %v173
    %621 = vmatprep.subr.mxu0 0.0
    %622 = vmatpush2.msra.mxu0 %v172
    %623 = vmatprep.subr.mxu0 0.0
    %624 = vmatpush2.msra.mxu0 %v171
    %625 = vmatprep.subr.mxu0 0.0
    %626 = vmatpush2.msra.mxu0 %v170
    %627 = vmatprep.mubr.f32.mxu0 %v47
    %628 = vmatmul.mubr.f32.gmra.mxu0 %v46
    %v629 = vpop.f32.mrf.mxu0
    %v630 = vadd.f32 %v560, %v629
    %v631 = vpop.f32.mrf.mxu0
    %632 = vdwg.mxu0
    %633 = vmatprep.subr.mxu0 0.0
    %634 = vmatpush1.msra.mxu0 %v201
    %635 = vmatprep.subr.mxu0 0.0
    %636 = vmatpush1.msra.mxu0 %v200
    %637 = vmatprep.subr.mxu0 0.0
    %638 = vmatpush1.msra.mxu0 %v199
    %639 = vmatprep.subr.mxu0 0.0
    %640 = vmatpush1.msra.mxu0 %v198
    %641 = vmatprep.subr.mxu0 0.0
    %642 = vmatpush1.msra.mxu0 %v197
    %643 = vmatprep.subr.mxu0 0.0
    %644 = vmatpush1.msra.mxu0 %v196
    %645 = vmatprep.subr.mxu0 0.0
    %646 = vmatpush1.msra.mxu0 %v195
    %647 = vmatprep.subr.mxu0 0.0
    %648 = vmatpush1.msra.mxu0 %v194
    %649 = vmatprep.subr.mxu0 0.0
    %650 = vmatpush1.msra.mxu0 %v193
    %651 = vmatprep.subr.mxu0 0.0
    %652 = vmatpush1.msra.mxu0 %v192
    %653 = vmatprep.subr.mxu0 0.0
    %654 = vmatpush1.msra.mxu0 %v191
    %655 = vmatprep.subr.mxu0 0.0
    %656 = vmatpush1.msra.mxu0 %v190
    %657 = vmatprep.subr.mxu0 0.0
    %658 = vmatpush1.msra.mxu0 %v189
    %659 = vmatprep.subr.mxu0 0.0
    %660 = vmatpush1.msra.mxu0 %v188
    %661 = vmatprep.subr.mxu0 0.0
    %662 = vmatpush1.msra.mxu0 %v187
    %663 = vmatprep.subr.mxu0 0.0
    %664 = vmatpush1.msra.mxu0 %v186
    %665 = vmatprep.subr.mxu0 0.0
    %666 = vmatpush2.msra.mxu0 %v217
    %667 = vmatprep.subr.mxu0 0.0
    %668 = vmatpush2.msra.mxu0 %v216
    %669 = vmatprep.subr.mxu0 0.0
    %670 = vmatpush2.msra.mxu0 %v215
    %671 = vmatprep.subr.mxu0 0.0
    %672 = vmatpush2.msra.mxu0 %v214
    %673 = vmatprep.subr.mxu0 0.0
    %674 = vmatpush2.msra.mxu0 %v213
    %675 = vmatprep.subr.mxu0 0.0
    %676 = vmatpush2.msra.mxu0 %v212
    %677 = vmatprep.subr.mxu0 0.0
    %678 = vmatpush2.msra.mxu0 %v211
    %679 = vmatprep.subr.mxu0 0.0
    %680 = vmatpush2.msra.mxu0 %v210
    %681 = vmatprep.subr.mxu0 0.0
    %682 = vmatpush2.msra.mxu0 %v209
    %683 = vmatprep.subr.mxu0 0.0
    %684 = vmatpush2.msra.mxu0 %v208
    %685 = vmatprep.subr.mxu0 0.0
    %686 = vmatpush2.msra.mxu0 %v207
    %687 = vmatprep.subr.mxu0 0.0
    %688 = vmatpush2.msra.mxu0 %v206
    %689 = vmatprep.subr.mxu0 0.0
    %690 = vmatpush2.msra.mxu0 %v205
    %691 = vmatprep.subr.mxu0 0.0
    %692 = vmatpush2.msra.mxu0 %v204
    %693 = vmatprep.subr.mxu0 0.0
    %694 = vmatpush2.msra.mxu0 %v203
    %695 = vmatprep.subr.mxu0 0.0
    %696 = vmatpush2.msra.mxu0 %v202
    %697 = vmatprep.mubr.f32.mxu0 %v49
    %698 = vmatmul.mubr.f32.gmra.mxu0 %v48
    %v699 = vpop.f32.mrf.mxu0
    %v700 = vadd.f32 %v630, %v699
    %v701 = vpop.f32.mrf.mxu0
    %702 = vdwg.mxu0
    %703 = vmatprep.subr.mxu0 0.0
    %704 = vmatpush1.msra.mxu0 %v233
    %705 = vmatprep.subr.mxu0 0.0
    %706 = vmatpush1.msra.mxu0 %v232
    %707 = vmatprep.subr.mxu0 0.0
    %708 = vmatpush1.msra.mxu0 %v231
    %709 = vmatprep.subr.mxu0 0.0
    %710 = vmatpush1.msra.mxu0 %v230
    %711 = vmatprep.subr.mxu0 0.0
    %712 = vmatpush1.msra.mxu0 %v229
    %713 = vmatprep.subr.mxu0 0.0
    %714 = vmatpush1.msra.mxu0 %v228
    %715 = vmatprep.subr.mxu0 0.0
    %716 = vmatpush1.msra.mxu0 %v227
    %717 = vmatprep.subr.mxu0 0.0
    %718 = vmatpush1.msra.mxu0 %v226
    %719 = vmatprep.subr.mxu0 0.0
    %720 = vmatpush1.msra.mxu0 %v225
    %721 = vmatprep.subr.mxu0 0.0
    %722 = vmatpush1.msra.mxu0 %v224
    %723 = vmatprep.subr.mxu0 0.0
    %724 = vmatpush1.msra.mxu0 %v223
    %725 = vmatprep.subr.mxu0 0.0
    %726 = vmatpush1.msra.mxu0 %v222
    %727 = vmatprep.subr.mxu0 0.0
    %728 = vmatpush1.msra.mxu0 %v221
    %729 = vmatprep.subr.mxu0 0.0
    %730 = vmatpush1.msra.mxu0 %v220
    %731 = vmatprep.subr.mxu0 0.0
    %732 = vmatpush1.msra.mxu0 %v219
    %733 = vmatprep.subr.mxu0 0.0
    %734 = vmatpush1.msra.mxu0 %v218
    %735 = vmatprep.subr.mxu0 0.0
    %736 = vmatpush2.msra.mxu0 %v249
    %737 = vmatprep.subr.mxu0 0.0
    %738 = vmatpush2.msra.mxu0 %v248
    %739 = vmatprep.subr.mxu0 0.0
    %740 = vmatpush2.msra.mxu0 %v247
    %741 = vmatprep.subr.mxu0 0.0
    %742 = vmatpush2.msra.mxu0 %v246
    %743 = vmatprep.subr.mxu0 0.0
    %744 = vmatpush2.msra.mxu0 %v245
    %745 = vmatprep.subr.mxu0 0.0
    %746 = vmatpush2.msra.mxu0 %v244
    %747 = vmatprep.subr.mxu0 0.0
    %748 = vmatpush2.msra.mxu0 %v243
    %749 = vmatprep.subr.mxu0 0.0
    %750 = vmatpush2.msra.mxu0 %v242
    %751 = vmatprep.subr.mxu0 0.0
    %752 = vmatpush2.msra.mxu0 %v241
    %753 = vmatprep.subr.mxu0 0.0
    %754 = vmatpush2.msra.mxu0 %v240
    %755 = vmatprep.subr.mxu0 0.0
    %756 = vmatpush2.msra.mxu0 %v239
    %757 = vmatprep.subr.mxu0 0.0
    %758 = vmatpush2.msra.mxu0 %v238
    %759 = vmatprep.subr.mxu0 0.0
    %760 = vmatpush2.msra.mxu0 %v237
    %761 = vmatprep.subr.mxu0 0.0
    %762 = vmatpush2.msra.mxu0 %v236
    %763 = vmatprep.subr.mxu0 0.0
    %764 = vmatpush2.msra.mxu0 %v235
    %765 = vmatprep.subr.mxu0 0.0
    %766 = vmatpush2.msra.mxu0 %v234
    %767 = vmatprep.mubr.f32.mxu0 %v51
    %768 = vmatmul.mubr.f32.gmra.mxu0 %v50
    %v769 = vpop.f32.mrf.mxu0
    %v770 = vadd.f32 %v700, %v769
    %v771 = vpop.f32.mrf.mxu0
    %772 = vdwg.mxu0
    %773 = vmatprep.subr.mxu0 0.0
    %774 = vmatpush1.msra.mxu0 %v265
    %775 = vmatprep.subr.mxu0 0.0
    %776 = vmatpush1.msra.mxu0 %v264
    %777 = vmatprep.subr.mxu0 0.0
    %778 = vmatpush1.msra.mxu0 %v263
    %779 = vmatprep.subr.mxu0 0.0
    %780 = vmatpush1.msra.mxu0 %v262
    %781 = vmatprep.subr.mxu0 0.0
    %782 = vmatpush1.msra.mxu0 %v261
    %783 = vmatprep.subr.mxu0 0.0
    %784 = vmatpush1.msra.mxu0 %v260
    %785 = vmatprep.subr.mxu0 0.0
    %786 = vmatpush1.msra.mxu0 %v259
    %787 = vmatprep.subr.mxu0 0.0
    %788 = vmatpush1.msra.mxu0 %v258
    %789 = vmatprep.subr.mxu0 0.0
    %790 = vmatpush1.msra.mxu0 %v257
    %791 = vmatprep.subr.mxu0 0.0
    %792 = vmatpush1.msra.mxu0 %v256
    %793 = vmatprep.subr.mxu0 0.0
    %794 = vmatpush1.msra.mxu0 %v255
    %795 = vmatprep.subr.mxu0 0.0
    %796 = vmatpush1.msra.mxu0 %v254
    %797 = vmatprep.subr.mxu0 0.0
    %798 = vmatpush1.msra.mxu0 %v253
    %799 = vmatprep.subr.mxu0 0.0
    %800 = vmatpush1.msra.mxu0 %v252
    %801 = vmatprep.subr.mxu0 0.0
    %802 = vmatpush1.msra.mxu0 %v251
    %803 = vmatprep.subr.mxu0 0.0
    %804 = vmatpush1.msra.mxu0 %v250
    %805 = vmatprep.subr.mxu0 0.0
    %806 = vmatpush2.msra.mxu0 %v281
    %807 = vmatprep.subr.mxu0 0.0
    %808 = vmatpush2.msra.mxu0 %v280
    %809 = vmatprep.subr.mxu0 0.0
    %810 = vmatpush2.msra.mxu0 %v279
    %811 = vmatprep.subr.mxu0 0.0
    %812 = vmatpush2.msra.mxu0 %v278
    %813 = vmatprep.subr.mxu0 0.0
    %814 = vmatpush2.msra.mxu0 %v277
    %815 = vmatprep.subr.mxu0 0.0
    %816 = vmatpush2.msra.mxu0 %v276
    %817 = vmatprep.subr.mxu0 0.0
    %818 = vmatpush2.msra.mxu0 %v275
    %819 = vmatprep.subr.mxu0 0.0
    %820 = vmatpush2.msra.mxu0 %v274
    %821 = vmatprep.subr.mxu0 0.0
    %822 = vmatpush2.msra.mxu0 %v273
    %823 = vmatprep.subr.mxu0 0.0
    %824 = vmatpush2.msra.mxu0 %v272
    %825 = vmatprep.subr.mxu0 0.0
    %826 = vmatpush2.msra.mxu0 %v271
    %827 = vmatprep.subr.mxu0 0.0
    %828 = vmatpush2.msra.mxu0 %v270
    %829 = vmatprep.subr.mxu0 0.0
    %830 = vmatpush2.msra.mxu0 %v269
    %831 = vmatprep.subr.mxu0 0.0
    %832 = vmatpush2.msra.mxu0 %v268
    %833 = vmatprep.subr.mxu0 0.0
    %834 = vmatpush2.msra.mxu0 %v267
    %835 = vmatprep.subr.mxu0 0.0
    %836 = vmatpush2.msra.mxu0 %v266
    %837 = vmatprep.mubr.f32.mxu0 %v53
    %838 = vmatmul.mubr.f32.gmra.mxu0 %v52
    %v839 = vpop.f32.mrf.mxu0
    %v840 = vadd.f32 %v770, %v839
    %v841 = vpop.f32.mrf.mxu0
    %842 = vdwg.mxu0
    %843 = vmatprep.subr.mxu0 0.0
    %844 = vmatpush1.msra.mxu0 %v297
    %845 = vmatprep.subr.mxu0 0.0
    %846 = vmatpush1.msra.mxu0 %v296
    %847 = vmatprep.subr.mxu0 0.0
    %848 = vmatpush1.msra.mxu0 %v295
    %849 = vmatprep.subr.mxu0 0.0
    %850 = vmatpush1.msra.mxu0 %v294
    %851 = vmatprep.subr.mxu0 0.0
    %852 = vmatpush1.msra.mxu0 %v293
    %853 = vmatprep.subr.mxu0 0.0
    %854 = vmatpush1.msra.mxu0 %v292
    %855 = vmatprep.subr.mxu0 0.0
    %856 = vmatpush1.msra.mxu0 %v291
    %857 = vmatprep.subr.mxu0 0.0
    %858 = vmatpush1.msra.mxu0 %v290
    %859 = vmatprep.subr.mxu0 0.0
    %860 = vmatpush1.msra.mxu0 %v289
    %861 = vmatprep.subr.mxu0 0.0
    %862 = vmatpush1.msra.mxu0 %v288
    %863 = vmatprep.subr.mxu0 0.0
    %864 = vmatpush1.msra.mxu0 %v287
    %865 = vmatprep.subr.mxu0 0.0
    %866 = vmatpush1.msra.mxu0 %v286
    %867 = vmatprep.subr.mxu0 0.0
    %868 = vmatpush1.msra.mxu0 %v285
    %869 = vmatprep.subr.mxu0 0.0
    %870 = vmatpush1.msra.mxu0 %v284
    %871 = vmatprep.subr.mxu0 0.0
    %872 = vmatpush1.msra.mxu0 %v283
    %873 = vmatprep.subr.mxu0 0.0
    %874 = vmatpush1.msra.mxu0 %v282
    %875 = vmatprep.subr.mxu0 0.0
    %876 = vmatpush2.msra.mxu0 %v313
    %877 = vmatprep.subr.mxu0 0.0
    %878 = vmatpush2.msra.mxu0 %v312
    %879 = vmatprep.subr.mxu0 0.0
    %880 = vmatpush2.msra.mxu0 %v311
    %881 = vmatprep.subr.mxu0 0.0
    %882 = vmatpush2.msra.mxu0 %v310
    %883 = vmatprep.subr.mxu0 0.0
    %884 = vmatpush2.msra.mxu0 %v309
    %885 = vmatprep.subr.mxu0 0.0
    %886 = vmatpush2.msra.mxu0 %v308
    %887 = vmatprep.subr.mxu0 0.0
    %888 = vmatpush2.msra.mxu0 %v307
    %889 = vmatprep.subr.mxu0 0.0
    %890 = vmatpush2.msra.mxu0 %v306
    %891 = vmatprep.subr.mxu0 0.0
    %892 = vmatpush2.msra.mxu0 %v305
    %893 = vmatprep.subr.mxu0 0.0
    %894 = vmatpush2.msra.mxu0 %v304
    %895 = vmatprep.subr.mxu0 0.0
    %896 = vmatpush2.msra.mxu0 %v303
    %897 = vmatprep.subr.mxu0 0.0
    %898 = vmatpush2.msra.mxu0 %v302
    %899 = vmatprep.subr.mxu0 0.0
    %900 = vmatpush2.msra.mxu0 %v301
    %901 = vmatprep.subr.mxu0 0.0
    %902 = vmatpush2.msra.mxu0 %v300
    %903 = vmatprep.subr.mxu0 0.0
    %904 = vmatpush2.msra.mxu0 %v299
    %905 = vmatprep.subr.mxu0 0.0
    %906 = vmatpush2.msra.mxu0 %v298
    %907 = vmatprep.mubr.f32.mxu0 %v55
    %908 = vmatmul.mubr.f32.gmra.mxu0 %v54
    %v909 = vpop.f32.mrf.mxu0
    %v910 = vadd.f32 %v840, %v909
    %v911 = vpop.f32.mrf.mxu0
    %912 = vdwg.mxu0
    %913 = vmatprep.subr.mxu0 0.0
    %914 = vmatpush1.msra.mxu0 %v329
    %915 = vmatprep.subr.mxu0 0.0
    %916 = vmatpush1.msra.mxu0 %v328
    %917 = vmatprep.subr.mxu0 0.0
    %918 = vmatpush1.msra.mxu0 %v327
    %919 = vmatprep.subr.mxu0 0.0
    %920 = vmatpush1.msra.mxu0 %v326
    %921 = vmatprep.subr.mxu0 0.0
    %922 = vmatpush1.msra.mxu0 %v325
    %923 = vmatprep.subr.mxu0 0.0
    %924 = vmatpush1.msra.mxu0 %v324
    %925 = vmatprep.subr.mxu0 0.0
    %926 = vmatpush1.msra.mxu0 %v323
    %927 = vmatprep.subr.mxu0 0.0
    %928 = vmatpush1.msra.mxu0 %v322
    %929 = vmatprep.subr.mxu0 0.0
    %930 = vmatpush1.msra.mxu0 %v321
    %931 = vmatprep.subr.mxu0 0.0
    %932 = vmatpush1.msra.mxu0 %v320
    %933 = vmatprep.subr.mxu0 0.0
    %934 = vmatpush1.msra.mxu0 %v319
    %935 = vmatprep.subr.mxu0 0.0
    %936 = vmatpush1.msra.mxu0 %v318
    %937 = vmatprep.subr.mxu0 0.0
    %938 = vmatpush1.msra.mxu0 %v317
    %939 = vmatprep.subr.mxu0 0.0
    %940 = vmatpush1.msra.mxu0 %v316
    %941 = vmatprep.subr.mxu0 0.0
    %942 = vmatpush1.msra.mxu0 %v315
    %943 = vmatprep.subr.mxu0 0.0
    %944 = vmatpush1.msra.mxu0 %v314
    %945 = vmatprep.subr.mxu0 0.0
    %946 = vmatpush2.msra.mxu0 %v345
    %947 = vmatprep.subr.mxu0 0.0
    %948 = vmatpush2.msra.mxu0 %v344
    %949 = vmatprep.subr.mxu0 0.0
    %950 = vmatpush2.msra.mxu0 %v343
    %951 = vmatprep.subr.mxu0 0.0
    %952 = vmatpush2.msra.mxu0 %v342
    %953 = vmatprep.subr.mxu0 0.0
    %954 = vmatpush2.msra.mxu0 %v341
    %955 = vmatprep.subr.mxu0 0.0
    %956 = vmatpush2.msra.mxu0 %v340
    %957 = vmatprep.subr.mxu0 0.0
    %958 = vmatpush2.msra.mxu0 %v339
    %959 = vmatprep.subr.mxu0 0.0
    %960 = vmatpush2.msra.mxu0 %v338
    %961 = vmatprep.subr.mxu0 0.0
    %962 = vmatpush2.msra.mxu0 %v337
    %963 = vmatprep.subr.mxu0 0.0
    %964 = vmatpush2.msra.mxu0 %v336
    %965 = vmatprep.subr.mxu0 0.0
    %966 = vmatpush2.msra.mxu0 %v335
    %967 = vmatprep.subr.mxu0 0.0
    %968 = vmatpush2.msra.mxu0 %v334
    %969 = vmatprep.subr.mxu0 0.0
    %970 = vmatpush2.msra.mxu0 %v333
    %971 = vmatprep.subr.mxu0 0.0
    %972 = vmatpush2.msra.mxu0 %v332
    %973 = vmatprep.subr.mxu0 0.0
    %974 = vmatpush2.msra.mxu0 %v331
    %975 = vmatprep.subr.mxu0 0.0
    %976 = vmatpush2.msra.mxu0 %v330
    %977 = vmatprep.mubr.f32.mxu0 %v57
    %978 = vmatmul.mubr.f32.gmra.mxu0 %v56
    %v979 = vpop.f32.mrf.mxu0
    %v980 = vadd.f32 %v910, %v979
    %v981 = vpop.f32.mrf.mxu0
    %982 = vdwg.mxu0
    %983 = vst [vmem:[%s3] sm:$0xff] %v980
    // Predicated region
    $region22: #{conv1x1.1} parent=1 // pred_check
      _
    $region23: #{conv1x1.1} parent=1 // pred_check_branch
      %985 = sbr.rel (0) target = $region25
    $region24: #{conv1x1.1} parent=1 // pred_region
      _
    $region25: #{conv1x1.1} parent=1 // pred_fallthru
      _
    // Predicated region
    $region26: #{conv1x1.1} parent=1 // pred_check
      _
    $region27: #{conv1x1.1} parent=1 // pred_check_branch
      %987 = sbr.rel (0) target = $region29
    $region28: #{conv1x1.1} parent=1 // pred_region
      _
    $region29: #{conv1x1.1} parent=1 // pred_fallthru
      _
    %988 = vsyncpa [#allocation3], 1
    %989 = vsyncpa [#allocation5], 1

</llo_original>
